<compile_context>
chip_gen: v5e
topology: v5e:2x2
jax: 0.10.0
libtpu: 0.0.40
codegen_flags: <defaults>
</compile_context>

<pallas_src>
import functools

import jax
import jax.numpy as jnp
from jax.experimental import pallas as pl
from jax.experimental.pallas import tpu as pltpu


def _round_up(n, m):
    return ((n + m - 1) // m) * m


def _head_kernel(x_ref, w1_ref, b1_ref, w2_ref, b2_ref, w3_ref, b3_ref, o_ref):
    slope = 0.01  # nn.LeakyReLU default negative_slope

    x = x_ref[...]

    # --- Linear(F, F) [BatchNorm folded in] + LeakyReLU ---
    h = jnp.dot(x, w1_ref[...], preferred_element_type=jnp.float32) + b1_ref[...]
    h = jnp.maximum(h, slope * h)

    # --- Dropout(p): identity in eval mode ---
    # TODO(synk): training-mode BatchNorm (batch statistics) and Dropout masking
    # are not implemented; eval-mode semantics are used.

    # --- Linear(F, F) + LeakyReLU ---
    h = jnp.dot(h.astype(w2_ref.dtype), w2_ref[...],
                preferred_element_type=jnp.float32) + b2_ref[...]
    h = jnp.maximum(h, slope * h)

    # --- Linear(F, num_classes) ---
    out = jnp.dot(h.astype(w3_ref.dtype), w3_ref[...],
                  preferred_element_type=jnp.float32) + b3_ref[...]
    o_ref[...] = out.astype(o_ref.dtype)


@functools.partial(jax.jit, static_argnames=("block_b", "compute_dtype"))
def classification_head(x, params, *, block_b=128, compute_dtype=jnp.float32):
    """Eval-mode ClassificationHead forward.

    x: (B, F) float32.
    params: BN stats (gamma/beta/running_mean/running_var) and Linear weights
            w1/w2/w3 stored pre-transposed as (in, out), biases b1/b2/b3.
    """
    B, F = x.shape
    C = params["w3"].shape[1]
    eps = 1e-5

    # ---- Fold BatchNorm1d (eval) into the first Linear (exact algebra). ----
    scale = params["gamma"] * jax.lax.rsqrt(params["running_var"] + eps)   # (F,)
    shift = params["beta"] - params["running_mean"] * scale                # (F,)
    w1 = scale[:, None] * params["w1"]                                     # (F, F)
    b1 = params["b1"] + shift @ params["w1"]                               # (F,)
    w2, b2 = params["w2"], params["b2"]
    w3, b3 = params["w3"], params["b3"]

    # ---- Pad feature / hidden / class dims to 128 lanes (lane-dense). ----
    Fp = _round_up(F, 128)
    Cp = _round_up(C, 128)

    def pad2(w, r, c):
        return jnp.pad(w, ((0, r - w.shape[0]), (0, c - w.shape[1])))

    xk = pad2(x, B, Fp).astype(compute_dtype)
    w1p = pad2(w1, Fp, Fp).astype(compute_dtype)
    w2p = pad2(w2, Fp, Fp).astype(compute_dtype)
    w3p = pad2(w3, Fp, Cp).astype(compute_dtype)
    b1p = jnp.pad(b1, (0, Fp - F)).reshape(1, Fp).astype(jnp.float32)
    b2p = jnp.pad(b2, (0, Fp - F)).reshape(1, Fp).astype(jnp.float32)
    b3p = jnp.pad(b3, (0, Cp - C)).reshape(1, Cp).astype(jnp.float32)

    block_b = min(block_b, _round_up(B, 8))
    grid = (pl.cdiv(B, block_b),)
    rep = lambda i: (0, 0)  # grid-invariant operands (weights / biases)

    out_pad = pl.pallas_call(
        _head_kernel,
        out_shape=jax.ShapeDtypeStruct((B, Cp), x.dtype),
        grid_spec=pltpu.PrefetchScalarGridSpec(
            num_scalar_prefetch=0,
            grid=grid,
            in_specs=[
                pl.BlockSpec((block_b, Fp), lambda i: (i, 0)),  # x tile
                pl.BlockSpec((Fp, Fp), rep),                    # w1 (BN folded)
                pl.BlockSpec((1, Fp), rep),                     # b1
                pl.BlockSpec((Fp, Fp), rep),                    # w2
                pl.BlockSpec((1, Fp), rep),                     # b2
                pl.BlockSpec((Fp, Cp), rep),                    # w3
                pl.BlockSpec((1, Cp), rep),                     # b3
            ],
            out_specs=pl.BlockSpec((block_b, Cp), lambda i: (i, 0)),
        ),
        compiler_params=pltpu.CompilerParams(
            dimension_semantics=("parallel",)),
    )(xk, w1p, b1p, w2p, b2p, w3p, b3p)

    # Lane-dense (B, Cp) slab written by the kernel; slice real classes here.
    return out_pad[:, :C]


def _reference(x, params):
    eps = 1e-5
    slope = 0.01
    h = (x - params["running_mean"]) * jax.lax.rsqrt(params["running_var"] + eps)
    h = h * params["gamma"] + params["beta"]
    h = h @ params["w1"] + params["b1"]
    h = jnp.where(h > 0, h, slope * h)
    h = h @ params["w2"] + params["b2"]
    h = jnp.where(h > 0, h, slope * h)
    return h @ params["w3"] + params["b3"]


def _init_params(key, in_features, num_classes):
    ks = jax.random.split(key, 6)
    scale = 1.0 / jnp.sqrt(in_features)
    # Linear weights stored pre-transposed as (in, out); PyTorch stores (out, in).
    return {
        "gamma": jnp.ones((in_features,), jnp.float32),
        "beta": jnp.zeros((in_features,), jnp.float32),
        "running_mean": jnp.zeros((in_features,), jnp.float32),
        "running_var": jnp.ones((in_features,), jnp.float32),
        "w1": jax.random.uniform(ks[0], (in_features, in_features), jnp.float32,
                                 -scale, scale),
        "b1": jax.random.uniform(ks[1], (in_features,), jnp.float32, -scale, scale),
        "w2": jax.random.uniform(ks[2], (in_features, in_features), jnp.float32,
                                 -scale, scale),
        "b2": jax.random.uniform(ks[3], (in_features,), jnp.float32, -scale, scale),
        "w3": jax.random.uniform(ks[4], (in_features, num_classes), jnp.float32,
                                 -scale, scale),
        "b3": jax.random.uniform(ks[5], (num_classes,), jnp.float32, -scale, scale),
    }


if __name__ == "__main__":
    key = jax.random.PRNGKey(0)
    kx, kp = jax.random.split(key)

    # n_head_layers = 3, drop_path_rate = 0.1 (dropout is identity in eval).
    B, F, C = 256, 32, 8  # batch, in_features, num_classes
    x = jax.random.normal(kx, (B, F), jnp.float32)
    params = _init_params(kp, F, C)

    ref = _reference(x, params)

    # f32 operands: exact-ish vs reference.
    out = classification_head(x, params, block_b=128)  # grid=(2,) -> both v7x TCs
    out = jax.block_until_ready(out)
    assert out.shape == (B, C)
    assert jnp.allclose(out, ref, atol=1e-4, rtol=1e-4), "f32 mismatch vs reference"

    # bf16 matmul operands (v6e/v7x MXU-native) with f32 accumulation.
    out_bf16 = jax.block_until_ready(
        classification_head(x, params, block_b=128, compute_dtype=jnp.bfloat16))
    assert out_bf16.shape == (B, C)
    assert jnp.allclose(out_bf16, ref, atol=5e-2, rtol=5e-2), "bf16 mismatch vs reference"

    print("KERNEL_OK")
</pallas_src>

<mosaic_0001>
module attributes {stable_mosaic.version = 11 : i64} {
  func.func @_head_kernel(%arg0: i32, %arg1: memref<128x128xf32, #tpu.memory_space<vmem>>, %arg2: memref<128x128xf32, #tpu.memory_space<vmem>>, %arg3: memref<1x128xf32, #tpu.memory_space<vmem>>, %arg4: memref<128x128xf32, #tpu.memory_space<vmem>>, %arg5: memref<1x128xf32, #tpu.memory_space<vmem>>, %arg6: memref<128x128xf32, #tpu.memory_space<vmem>>, %arg7: memref<1x128xf32, #tpu.memory_space<vmem>>, %arg8: memref<128x128xf32, #tpu.memory_space<vmem>>) attributes {dimension_semantics = [#tpu.dimension_semantics<parallel>], iteration_bounds = array<i64: 2>, scalar_prefetch = 0 : i64, scratch_operands = 0 : i64, tpu.core_type = #tpu.core_type<tc>, window_params = [{transform_indices = @transform_0, window_bounds = array<i64: 128, 128>}, {pipeline_mode = #tpu.pipeline_mode<synchronous>, transform_indices = @transform_1, window_bounds = array<i64: 128, 128>}, {pipeline_mode = #tpu.pipeline_mode<synchronous>, transform_indices = @transform_2, window_bounds = array<i64: 1, 128>}, {pipeline_mode = #tpu.pipeline_mode<synchronous>, transform_indices = @transform_3, window_bounds = array<i64: 128, 128>}, {pipeline_mode = #tpu.pipeline_mode<synchronous>, transform_indices = @transform_4, window_bounds = array<i64: 1, 128>}, {pipeline_mode = #tpu.pipeline_mode<synchronous>, transform_indices = @transform_5, window_bounds = array<i64: 128, 128>}, {pipeline_mode = #tpu.pipeline_mode<synchronous>, transform_indices = @transform_6, window_bounds = array<i64: 1, 128>}, {transform_indices = @transform_7, window_bounds = array<i64: 128, 128>}]} {
    %c0 = arith.constant 0 : index
    %c0_0 = arith.constant 0 : index
    %0 = vector.load %arg1[%c0, %c0_0] : memref<128x128xf32, #tpu.memory_space<vmem>>, vector<128x128xf32>
    %c0_1 = arith.constant 0 : index
    %c0_2 = arith.constant 0 : index
    %1 = vector.load %arg2[%c0_1, %c0_2] : memref<128x128xf32, #tpu.memory_space<vmem>>, vector<128x128xf32>
    %cst = arith.constant dense<0.000000e+00> : vector<128x128xf32>
    %2 = tpu.matmul %0, %1, %cst {dimension_numbers = #tpu.dot_dimension_numbers<[1], [0], [0], [1], [0, 0, 1, 1], [], []>} : vector<128x128xf32>, vector<128x128xf32>, vector<128x128xf32> -> vector<128x128xf32>
    %c0_3 = arith.constant 0 : index
    %c0_4 = arith.constant 0 : index
    %3 = vector.load %arg3[%c0_3, %c0_4] : memref<1x128xf32, #tpu.memory_space<vmem>>, vector<1x128xf32>
    %4 = vector.broadcast %3 : vector<1x128xf32> to vector<128x128xf32>
    %5 = arith.addf %2, %4 : vector<128x128xf32>
    %cst_5 = arith.constant 0.00999999977 : f32
    %6 = vector.broadcast %cst_5 : f32 to vector<128x128xf32>
    %7 = arith.mulf %6, %5 : vector<128x128xf32>
    %8 = arith.maximumf %5, %7 : vector<128x128xf32>
    %c0_6 = arith.constant 0 : index
    %c0_7 = arith.constant 0 : index
    %9 = vector.load %arg4[%c0_6, %c0_7] : memref<128x128xf32, #tpu.memory_space<vmem>>, vector<128x128xf32>
    %cst_8 = arith.constant dense<0.000000e+00> : vector<128x128xf32>
    %10 = tpu.matmul %8, %9, %cst_8 {dimension_numbers = #tpu.dot_dimension_numbers<[1], [0], [0], [1], [0, 0, 1, 1], [], []>} : vector<128x128xf32>, vector<128x128xf32>, vector<128x128xf32> -> vector<128x128xf32>
    %c0_9 = arith.constant 0 : index
    %c0_10 = arith.constant 0 : index
    %11 = vector.load %arg5[%c0_9, %c0_10] : memref<1x128xf32, #tpu.memory_space<vmem>>, vector<1x128xf32>
    %12 = vector.broadcast %11 : vector<1x128xf32> to vector<128x128xf32>
    %13 = arith.addf %10, %12 : vector<128x128xf32>
    %cst_11 = arith.constant 0.00999999977 : f32
    %14 = vector.broadcast %cst_11 : f32 to vector<128x128xf32>
    %15 = arith.mulf %14, %13 : vector<128x128xf32>
    %16 = arith.maximumf %13, %15 : vector<128x128xf32>
    %c0_12 = arith.constant 0 : index
    %c0_13 = arith.constant 0 : index
    %17 = vector.load %arg6[%c0_12, %c0_13] : memref<128x128xf32, #tpu.memory_space<vmem>>, vector<128x128xf32>
    %cst_14 = arith.constant dense<0.000000e+00> : vector<128x128xf32>
    %18 = tpu.matmul %16, %17, %cst_14 {dimension_numbers = #tpu.dot_dimension_numbers<[1], [0], [0], [1], [0, 0, 1, 1], [], []>} : vector<128x128xf32>, vector<128x128xf32>, vector<128x128xf32> -> vector<128x128xf32>
    %c0_15 = arith.constant 0 : index
    %c0_16 = arith.constant 0 : index
    %19 = vector.load %arg7[%c0_15, %c0_16] : memref<1x128xf32, #tpu.memory_space<vmem>>, vector<1x128xf32>
    %20 = vector.broadcast %19 : vector<1x128xf32> to vector<128x128xf32>
    %21 = arith.addf %18, %20 : vector<128x128xf32>
    %c0_17 = arith.constant 0 : index
    %c0_18 = arith.constant 0 : index
    %22 = vector.load %arg8[%c0_17, %c0_18] : memref<128x128xf32, #tpu.memory_space<vmem>>, vector<128x128xf32>
    tpu.vector_store %arg8[%c0_17, %c0_18], %21 {strides = array<i32>} : memref<128x128xf32, #tpu.memory_space<vmem>>, vector<128x128xf32>,
    return
  }
  func.func @transform_0(%arg0: i32) -> (i32, i32) {
    %c0_i32 = arith.constant 0 : i32
    %c0_i32_0 = arith.constant 0 : i32
    return %arg0, %c0_i32 : i32, i32
  }
  func.func @transform_1(%arg0: i32) -> (i32, i32) {
    %c0_i32 = arith.constant 0 : i32
    %c0_i32_0 = arith.constant 0 : i32
    %c0_i32_1 = arith.constant 0 : i32
    return %c0_i32, %c0_i32_0 : i32, i32
  }
  func.func @transform_2(%arg0: i32) -> (i32, i32) {
    %c0_i32 = arith.constant 0 : i32
    %c0_i32_0 = arith.constant 0 : i32
    %c0_i32_1 = arith.constant 0 : i32
    return %c0_i32, %c0_i32_0 : i32, i32
  }
  func.func @transform_3(%arg0: i32) -> (i32, i32) {
    %c0_i32 = arith.constant 0 : i32
    %c0_i32_0 = arith.constant 0 : i32
    %c0_i32_1 = arith.constant 0 : i32
    return %c0_i32, %c0_i32_0 : i32, i32
  }
  func.func @transform_4(%arg0: i32) -> (i32, i32) {
    %c0_i32 = arith.constant 0 : i32
    %c0_i32_0 = arith.constant 0 : i32
    %c0_i32_1 = arith.constant 0 : i32
    return %c0_i32, %c0_i32_0 : i32, i32
  }
  func.func @transform_5(%arg0: i32) -> (i32, i32) {
    %c0_i32 = arith.constant 0 : i32
    %c0_i32_0 = arith.constant 0 : i32
    %c0_i32_1 = arith.constant 0 : i32
    return %c0_i32, %c0_i32_0 : i32, i32
  }
  func.func @transform_6(%arg0: i32) -> (i32, i32) {
    %c0_i32 = arith.constant 0 : i32
    %c0_i32_0 = arith.constant 0 : i32
    %c0_i32_1 = arith.constant 0 : i32
    return %c0_i32, %c0_i32_0 : i32, i32
  }
  func.func @transform_7(%arg0: i32) -> (i32, i32) {
    %c0_i32 = arith.constant 0 : i32
    %c0_i32_0 = arith.constant 0 : i32
    return %arg0, %c0_i32 : i32, i32
  }
}

</mosaic_0001>

<llo_original>
// kernel: classification_head.1
$region0: #{classification_head.1}
  #allocation0 [shape = 'u32[]', space=smem, size = 0x4, offset = 0x4, fixed_abs, tag = 'smem constant byte address 0x4 - core index']
  #allocation1 [shape = 'u32[72,128]{1,0:T(1,128)}', space=vmem, size = 0x9000, scoped, tag = 'internal scratch']
  %s0 = inlined_call_operand.vmem [shape: f32[256,128], index: 0, kind: input, shape index: {}]
  %s1 = inlined_call_operand.vmem [shape: f32[128,128], index: 1, kind: input, shape index: {}]
  %s2 = inlined_call_operand.vmem [shape: f32[1,128], index: 2, kind: input, shape index: {}]
  %s3 = inlined_call_operand.vmem [shape: f32[128,128], index: 3, kind: input, shape index: {}]
  %s4 = inlined_call_operand.vmem [shape: f32[1,128], index: 4, kind: input, shape index: {}]
  %s5 = inlined_call_operand.vmem [shape: f32[128,128], index: 5, kind: input, shape index: {}]
  %s6 = inlined_call_operand.vmem [shape: f32[1,128], index: 6, kind: input, shape index: {}]
  %s7 = inlined_call_operand.vmem [shape: f32[256,128], index: 7, kind: output, shape index: {}]
  %s8 = sld [smem:[#allocation0]]
  $region61: #{classification_head.1} parent=0
    _
  %s10 = ssub.s32 1, %s8
  %s11 = scalar_select 0, %s10, %s8
  loop: start=0, step=1, limit=4
  $region2: #{classification_head.1} parent=0 // loop_pre_header
    _
  $region3: #{classification_head.1} parent=0 // loop_header
    %s13 = sphi 0, %s17
    %p14 = scmp.ge.s32.totalorder %s13, 4
    %s23 = sphi 0, %s25
    %s26 = sphi 0, %s23
    %s27 = sphi 0, %s26
    %s43 = sphi 0, %s27
    %s47 = sphi 0, %s47
    %s49 = sphi 0, %s47
    %s50 = sphi 0, %s49
    %s64 = sphi 0, %s50
    %s68 = sphi 0, %s68
    %s70 = sphi 0, %s68
    %s71 = sphi 0, %s70
    %s85 = sphi 0, %s71
    %s89 = sphi 0, %s89
    %s91 = sphi 0, %s89
    %s92 = sphi 0, %s91
    %s106 = sphi 0, %s92
    %s110 = sphi 0, %s110
    %s112 = sphi 0, %s110
    %s113 = sphi 0, %s112
    %s127 = sphi 0, %s113
    %s131 = sphi 0, %s131
    %s133 = sphi 0, %s131
    %s134 = sphi 0, %s133
    %s148 = sphi 0, %s134
    %s152 = sphi 0, %s152
    %s154 = sphi 0, %s152
    %s155 = sphi 0, %s154
    %s169 = sphi 0, %s155
    %s175 = sphi 0, %s177
    %s178 = sphi 0, %s175
    %s179 = sphi 0, %s178
    %s195 = sphi 0, %s179
  $region4: #{classification_head.1} parent=0 // loop_header_branch
    %16 = sbr.rel (%p14) target = $region8
  $region5: #{classification_head.1} parent=0 // loop_body
    %s18 = ssub.s32 %s13, 1
    %s19 = ssub.s32 %s13, 2
    %s20 = sadd.s32 %s13, 1
    %s21 = ssub.s32 %s13, %s20
    %p22 = scmp.eq.s32.totalorder %s21, 0
    %s24 = sadd.s32 %s23, 1
    %s25 = scalar_select %p22, %s23, %s24
    %p28 = pneg %p22
    %p29 = scmp.eq.s32.totalorder %s13, 1
    %p30 = por %p28, %p29
    %p31 = scmp.ne.s32.totalorder %s23, %s26
    %p32 = scmp.eq.s32.totalorder %s13, 0
    %p33 = por %p31, %p32
    %p34 = scmp.ne.s32.totalorder %s23, %s26
    %p35 = scmp.eq.s32.totalorder %s18, 1
    %p36 = por %p34, %p35
    %p37 = scmp.ne.s32.totalorder %s26, %s27
    %p38 = scmp.eq.s32.totalorder %s18, 0
    %p39 = por %p37, %p38
    %p40 = scmp.ne.s32.totalorder %s26, %s27
    %p41 = scmp.eq.s32.totalorder %s19, 1
    %p42 = por %p40, %p41
    %p44 = scmp.ne.s32.totalorder %s27, %s43
    %p45 = scmp.eq.s32.totalorder %s19, 0
    %p46 = por %p44, %p45
    %s48 = sadd.s32 %s47, 1
    %p51 = scmp.eq.s32.totalorder %s13, 1
    %p52 = scmp.ne.s32.totalorder %s47, %s49
    %p53 = scmp.eq.s32.totalorder %s13, 0
    %p54 = por %p52, %p53
    %p55 = scmp.ne.s32.totalorder %s47, %s49
    %p56 = scmp.eq.s32.totalorder %s18, 1
    %p57 = por %p55, %p56
    %p58 = scmp.ne.s32.totalorder %s49, %s50
    %p59 = scmp.eq.s32.totalorder %s18, 0
    %p60 = por %p58, %p59
    %p61 = scmp.ne.s32.totalorder %s49, %s50
    %p62 = scmp.eq.s32.totalorder %s19, 1
    %p63 = por %p61, %p62
    %p65 = scmp.ne.s32.totalorder %s50, %s64
    %p66 = scmp.eq.s32.totalorder %s19, 0
    %p67 = por %p65, %p66
    %s69 = sadd.s32 %s68, 1
    %p72 = scmp.eq.s32.totalorder %s13, 1
    %p73 = scmp.ne.s32.totalorder %s68, %s70
    %p74 = scmp.eq.s32.totalorder %s13, 0
    %p75 = por %p73, %p74
    %p76 = scmp.ne.s32.totalorder %s68, %s70
    %p77 = scmp.eq.s32.totalorder %s18, 1
    %p78 = por %p76, %p77
    %p79 = scmp.ne.s32.totalorder %s70, %s71
    %p80 = scmp.eq.s32.totalorder %s18, 0
    %p81 = por %p79, %p80
    %p82 = scmp.ne.s32.totalorder %s70, %s71
    %p83 = scmp.eq.s32.totalorder %s19, 1
    %p84 = por %p82, %p83
    %p86 = scmp.ne.s32.totalorder %s71, %s85
    %p87 = scmp.eq.s32.totalorder %s19, 0
    %p88 = por %p86, %p87
    %s90 = sadd.s32 %s89, 1
    %p93 = scmp.eq.s32.totalorder %s13, 1
    %p94 = scmp.ne.s32.totalorder %s89, %s91
    %p95 = scmp.eq.s32.totalorder %s13, 0
    %p96 = por %p94, %p95
    %p97 = scmp.ne.s32.totalorder %s89, %s91
    %p98 = scmp.eq.s32.totalorder %s18, 1
    %p99 = por %p97, %p98
    %p100 = scmp.ne.s32.totalorder %s91, %s92
    %p101 = scmp.eq.s32.totalorder %s18, 0
    %p102 = por %p100, %p101
    %p103 = scmp.ne.s32.totalorder %s91, %s92
    %p104 = scmp.eq.s32.totalorder %s19, 1
    %p105 = por %p103, %p104
    %p107 = scmp.ne.s32.totalorder %s92, %s106
    %p108 = scmp.eq.s32.totalorder %s19, 0
    %p109 = por %p107, %p108
    %s111 = sadd.s32 %s110, 1
    %p114 = scmp.eq.s32.totalorder %s13, 1
    %p115 = scmp.ne.s32.totalorder %s110, %s112
    %p116 = scmp.eq.s32.totalorder %s13, 0
    %p117 = por %p115, %p116
    %p118 = scmp.ne.s32.totalorder %s110, %s112
    %p119 = scmp.eq.s32.totalorder %s18, 1
    %p120 = por %p118, %p119
    %p121 = scmp.ne.s32.totalorder %s112, %s113
    %p122 = scmp.eq.s32.totalorder %s18, 0
    %p123 = por %p121, %p122
    %p124 = scmp.ne.s32.totalorder %s112, %s113
    %p125 = scmp.eq.s32.totalorder %s19, 1
    %p126 = por %p124, %p125
    %p128 = scmp.ne.s32.totalorder %s113, %s127
    %p129 = scmp.eq.s32.totalorder %s19, 0
    %p130 = por %p128, %p129
    %s132 = sadd.s32 %s131, 1
    %p135 = scmp.eq.s32.totalorder %s13, 1
    %p136 = scmp.ne.s32.totalorder %s131, %s133
    %p137 = scmp.eq.s32.totalorder %s13, 0
    %p138 = por %p136, %p137
    %p139 = scmp.ne.s32.totalorder %s131, %s133
    %p140 = scmp.eq.s32.totalorder %s18, 1
    %p141 = por %p139, %p140
    %p142 = scmp.ne.s32.totalorder %s133, %s134
    %p143 = scmp.eq.s32.totalorder %s18, 0
    %p144 = por %p142, %p143
    %p145 = scmp.ne.s32.totalorder %s133, %s134
    %p146 = scmp.eq.s32.totalorder %s19, 1
    %p147 = por %p145, %p146
    %p149 = scmp.ne.s32.totalorder %s134, %s148
    %p150 = scmp.eq.s32.totalorder %s19, 0
    %p151 = por %p149, %p150
    %s153 = sadd.s32 %s152, 1
    %p156 = scmp.eq.s32.totalorder %s13, 1
    %p157 = scmp.ne.s32.totalorder %s152, %s154
    %p158 = scmp.eq.s32.totalorder %s13, 0
    %p159 = por %p157, %p158
    %p160 = scmp.ne.s32.totalorder %s152, %s154
    %p161 = scmp.eq.s32.totalorder %s18, 1
    %p162 = por %p160, %p161
    %p163 = scmp.ne.s32.totalorder %s154, %s155
    %p164 = scmp.eq.s32.totalorder %s18, 0
    %p165 = por %p163, %p164
    %p166 = scmp.ne.s32.totalorder %s154, %s155
    %p167 = scmp.eq.s32.totalorder %s19, 1
    %p168 = por %p166, %p167
    %p170 = scmp.ne.s32.totalorder %s155, %s169
    %p171 = scmp.eq.s32.totalorder %s19, 0
    %p172 = por %p170, %p171
    %s173 = ssub.s32 %s13, %s20
    %p174 = scmp.eq.s32.totalorder %s173, 0
    %s176 = sadd.s32 %s175, 1
    %s177 = scalar_select %p174, %s175, %s176
    %p180 = pneg %p174
    %p181 = scmp.eq.s32.totalorder %s13, 1
    %p182 = por %p180, %p181
    %p183 = scmp.ne.s32.totalorder %s175, %s178
    %p184 = scmp.eq.s32.totalorder %s13, 0
    %p185 = por %p183, %p184
    %p186 = scmp.ne.s32.totalorder %s175, %s178
    %p187 = scmp.eq.s32.totalorder %s18, 1
    %p188 = por %p186, %p187
    %p189 = scmp.ne.s32.totalorder %s178, %s179
    %p190 = scmp.eq.s32.totalorder %s18, 0
    %p191 = por %p189, %p190
    %p192 = scmp.ne.s32.totalorder %s178, %s179
    %p193 = scmp.eq.s32.totalorder %s19, 1
    %p194 = por %p192, %p193
    %p196 = scmp.ne.s32.totalorder %s179, %s195
    %p197 = scmp.eq.s32.totalorder %s19, 0
    %p198 = por %p196, %p197
    %p199 = scmp.le.s32.totalorder 1, %s13
    %p200 = scmp.lt.s32.totalorder %s13, 3
    %p201 = pnand %p199, %p200
    %p202 = pneg %p201
    // Predicated region
    $region9: #{classification_head.1} parent=5 // pred_check
      _
    $region10: #{classification_head.1} parent=5 // pred_check_branch
      %204 = sbr.rel (%p201) target = $region12
    $region11: #{classification_head.1} parent=5 // pred_region
      %s205 = ssub.s32 %s13, 1
      // Predicated region
      $region13: #{classification_head.1} parent=11 // pred_check
        %p206 = pneg %p60
      $region14: #{classification_head.1} parent=11 // pred_check_branch
        %208 = sbr.rel (%p206) target = $region16
      $region15: #{classification_head.1} parent=11 // pred_region
        _
      $region16: #{classification_head.1} parent=11 // pred_fallthru
        _
      // Predicated region
      $region17: #{classification_head.1} parent=11 // pred_check
        %p209 = pneg %p81
      $region18: #{classification_head.1} parent=11 // pred_check_branch
        %211 = sbr.rel (%p209) target = $region20
      $region19: #{classification_head.1} parent=11 // pred_region
        _
      $region20: #{classification_head.1} parent=11 // pred_fallthru
        _
      // Predicated region
      $region21: #{classification_head.1} parent=11 // pred_check
        %p212 = pneg %p102
      $region22: #{classification_head.1} parent=11 // pred_check_branch
        %214 = sbr.rel (%p212) target = $region24
      $region23: #{classification_head.1} parent=11 // pred_region
        _
      $region24: #{classification_head.1} parent=11 // pred_fallthru
        _
      // Predicated region
      $region25: #{classification_head.1} parent=11 // pred_check
        %p215 = pneg %p123
      $region26: #{classification_head.1} parent=11 // pred_check_branch
        %217 = sbr.rel (%p215) target = $region28
      $region27: #{classification_head.1} parent=11 // pred_region
        _
      $region28: #{classification_head.1} parent=11 // pred_fallthru
        _
      // Predicated region
      $region29: #{classification_head.1} parent=11 // pred_check
        %p218 = pneg %p144
      $region30: #{classification_head.1} parent=11 // pred_check_branch
        %220 = sbr.rel (%p218) target = $region32
      $region31: #{classification_head.1} parent=11 // pred_region
        _
      $region32: #{classification_head.1} parent=11 // pred_fallthru
        _
      // Predicated region
      $region33: #{classification_head.1} parent=11 // pred_check
        %p221 = pneg %p165
      $region34: #{classification_head.1} parent=11 // pred_check_branch
        %223 = sbr.rel (%p221) target = $region36
      $region35: #{classification_head.1} parent=11 // pred_region
        _
      $region36: #{classification_head.1} parent=11 // pred_fallthru
        _
    $region12: #{classification_head.1} parent=5 // pred_fallthru
      _
    %p224 = scmp.lt.s32.totalorder %s13, 2
    // Predicated region
    $region37: #{classification_head.1} parent=5 // pred_check
      %p225 = pneg %p224
    $region38: #{classification_head.1} parent=5 // pred_check_branch
      %227 = sbr.rel (%p225) target = $region40
    $region39: #{classification_head.1} parent=5 // pred_region
      // Predicated region
      $region41: #{classification_head.1} parent=39 // pred_check
        %p228 = pneg %p33
      $region42: #{classification_head.1} parent=39 // pred_check_branch
        %230 = sbr.rel (%p228) target = $region44
      $region43: #{classification_head.1} parent=39 // pred_region
        %s231 = smul.u32 16, %s13
        %p232 = scmp.lt.s32.totalorder %s231, 31
        %s233 = scalar_select %p232, %s231, 31
        %s234 = smul.addr %s233, 8
        %s235 = scalar_lea.vmem %s0, %s234
        %s236 = smul.u32 16, %s13
      $region44: #{classification_head.1} parent=39 // pred_fallthru
        _
    $region40: #{classification_head.1} parent=5 // pred_fallthru
      _
    %p237 = scmp.le.s32.totalorder 1, %s13
    %p238 = scmp.lt.s32.totalorder %s13, 3
    %p239 = pnand %p237, %p238
    %p240 = pneg %p239
    // Predicated region
    $region45: #{classification_head.1} parent=5 // pred_check
      _
    $region46: #{classification_head.1} parent=5 // pred_check_branch
      %242 = sbr.rel (%p239) target = $region48
    $region47: #{classification_head.1} parent=5 // pred_region
      %s243 = ssub.s32 %s13, 1
      %s244 = smul.u32 16, %s18
      %p245 = scmp.lt.s32.totalorder %s244, 31
      %s246 = scalar_select %p245, %s244, 31
      %s247 = smul.addr %s246, 8
      %s248 = scalar_lea.vmem %s0, %s247
      %p249 = pneg %p39
      %p250 = pneg %p36
      %p251 = pneg %p60
      %p252 = pneg %p57
      %p253 = pneg %p81
      %p254 = pneg %p78
      %p255 = pneg %p102
      %p256 = pneg %p99
      %p257 = pneg %p123
      %p258 = pneg %p120
      %p259 = pneg %p144
      %p260 = pneg %p141
      %p261 = pneg %p165
      %p262 = pneg %p162
      %p263 = pneg %p191
      %p264 = pneg %p188
      %s265 = smul.u32 16, %s18
      %p266 = scmp.lt.s32.totalorder %s265, 31
      %s267 = scalar_select %p266, %s265, 31
      %s268 = smul.addr %s267, 8
      %s269 = scalar_lea.vmem %s7, %s268
      %s270 = smul.u32 16, %s18
      %p271 = scmp.lt.s32.totalorder %s270, 31
      %s272 = scalar_select %p271, %s270, 31
      %s273 = smul.addr %s272, 8
      %s274 = scalar_lea.vmem %s0, %s273
      %s275 = smul.u32 16, %s18
      %s276 = smul.u32 16, %s18
      %p277 = scmp.lt.s32.totalorder %s276, 31
      %s278 = scalar_select %p277, %s276, 31
      %s279 = smul.addr %s278, 8
      %s280 = scalar_lea.vmem %s7, %s279
      %s281 = smul.u32 16, %s18
      %v282 = vld [vmem:[%s274] sm:$0xff]
      %v283 = vld [vmem:[%s274 + $0x8] sm:$0xff]
      %v284 = vld [vmem:[%s274 + $0x10] sm:$0xff]
      %v285 = vld [vmem:[%s274 + $0x18] sm:$0xff]
      %v286 = vld [vmem:[%s274 + $0x20] sm:$0xff]
      %v287 = vld [vmem:[%s274 + $0x28] sm:$0xff]
      %v288 = vld [vmem:[%s274 + $0x30] sm:$0xff]
      %v289 = vld [vmem:[%s274 + $0x38] sm:$0xff]
      %v290 = vld [vmem:[%s274 + $0x40] sm:$0xff]
      %v291 = vld [vmem:[%s274 + $0x48] sm:$0xff]
      %v292 = vld [vmem:[%s274 + $0x50] sm:$0xff]
      %v293 = vld [vmem:[%s274 + $0x58] sm:$0xff]
      %v294 = vld [vmem:[%s274 + $0x60] sm:$0xff]
      %v295 = vld [vmem:[%s274 + $0x68] sm:$0xff]
      %v296 = vld [vmem:[%s274 + $0x70] sm:$0xff]
      %v297 = vld [vmem:[%s274 + $0x78] sm:$0xff]
      %v298 = vld [vmem:[%s1] sm:$0xff]
      %v299 = vld [vmem:[%s1 + $0x8] sm:$0xff]
      %v300 = vld [vmem:[%s1 + $0x10] sm:$0xff]
      %v301 = vld [vmem:[%s1 + $0x18] sm:$0xff]
      %v302 = vld [vmem:[%s1 + $0x20] sm:$0xff]
      %v303 = vld [vmem:[%s1 + $0x28] sm:$0xff]
      %v304 = vld [vmem:[%s1 + $0x30] sm:$0xff]
      %v305 = vld [vmem:[%s1 + $0x38] sm:$0xff]
      %v306 = vld [vmem:[%s1 + $0x40] sm:$0xff]
      %v307 = vld [vmem:[%s1 + $0x48] sm:$0xff]
      %v308 = vld [vmem:[%s1 + $0x50] sm:$0xff]
      %v309 = vld [vmem:[%s1 + $0x58] sm:$0xff]
      %v310 = vld [vmem:[%s1 + $0x60] sm:$0xff]
      %v311 = vld [vmem:[%s1 + $0x68] sm:$0xff]
      %v312 = vld [vmem:[%s1 + $0x70] sm:$0xff]
      %v313 = vld [vmem:[%s1 + $0x78] sm:$0xff]
      %v314 = vld [vmem:[%s2] sm:$0x1]
      %v316 = vperm.slane %v314, 0
      %318 = vmatpush.msra.mxu0 %v313
      %319 = vmatpush.msra.mxu0 %v312
      %320 = vmatpush.msra.mxu0 %v311
      %321 = vmatpush.msra.mxu0 %v310
      %322 = vmatpush.msra.mxu0 %v309
      %323 = vmatpush.msra.mxu0 %v308
      %324 = vmatpush.msra.mxu0 %v307
      %325 = vmatpush.msra.mxu0 %v306
      %326 = vmatpush.msra.mxu0 %v305
      %327 = vmatpush.msra.mxu0 %v304
      %328 = vmatpush.msra.mxu0 %v303
      %329 = vmatpush.msra.mxu0 %v302
      %330 = vmatpush.msra.mxu0 %v301
      %331 = vmatpush.msra.mxu0 %v300
      %332 = vmatpush.msra.mxu0 %v299
      %333 = vmatpush.msra.mxu0 %v298
      %334 = vmatmul.f32.gmra.mxu0 %v282
      %v335 = vpop.f32.mrf.mxu0
      %v336 = vadd.f32 %v316, %v335
      %337 = vmatmul.f32.gmra.mxu0 %v283
      %v338 = vpop.f32.mrf.mxu0
      %v339 = vadd.f32 %v316, %v338
      %340 = vmatmul.f32.gmra.mxu0 %v284
      %v341 = vpop.f32.mrf.mxu0
      %v342 = vadd.f32 %v316, %v341
      %343 = vmatmul.f32.gmra.mxu0 %v285
      %v344 = vpop.f32.mrf.mxu0
      %v345 = vadd.f32 %v316, %v344
      %346 = vmatmul.f32.gmra.mxu0 %v286
      %v347 = vpop.f32.mrf.mxu0
      %v348 = vadd.f32 %v316, %v347
      %349 = vmatmul.f32.gmra.mxu0 %v287
      %v350 = vpop.f32.mrf.mxu0
      %v351 = vadd.f32 %v316, %v350
      %352 = vmatmul.f32.gmra.mxu0 %v288
      %v353 = vpop.f32.mrf.mxu0
      %v354 = vadd.f32 %v316, %v353
      %355 = vmatmul.f32.gmra.mxu0 %v289
      %v356 = vpop.f32.mrf.mxu0
      %v357 = vadd.f32 %v316, %v356
      %358 = vmatmul.f32.gmra.mxu0 %v290
      %v359 = vpop.f32.mrf.mxu0
      %v360 = vadd.f32 %v316, %v359
      %361 = vmatmul.f32.gmra.mxu0 %v291
      %v362 = vpop.f32.mrf.mxu0
      %v363 = vadd.f32 %v316, %v362
      %364 = vmatmul.f32.gmra.mxu0 %v292
      %v365 = vpop.f32.mrf.mxu0
      %v366 = vadd.f32 %v316, %v365
      %367 = vmatmul.f32.gmra.mxu0 %v293
      %v368 = vpop.f32.mrf.mxu0
      %v369 = vadd.f32 %v316, %v368
      %370 = vmatmul.f32.gmra.mxu0 %v294
      %v371 = vpop.f32.mrf.mxu0
      %v372 = vadd.f32 %v316, %v371
      %373 = vmatmul.f32.gmra.mxu0 %v295
      %v374 = vpop.f32.mrf.mxu0
      %v375 = vadd.f32 %v316, %v374
      %376 = vmatmul.f32.gmra.mxu0 %v296
      %v377 = vpop.f32.mrf.mxu0
      %v378 = vadd.f32 %v316, %v377
      %379 = vmatmul.f32.gmra.mxu0 %v297
      %v380 = vpop.f32.mrf.mxu0
      %v381 = vadd.f32 %v316, %v380
      %382 = vdwg.mxu0
      %v383 = vmul.f32 %v336, 0.01
      %v384 = vmul.f32 %v339, 0.01
      %v385 = vmul.f32 %v342, 0.01
      %v386 = vmul.f32 %v345, 0.01
      %v387 = vmul.f32 %v348, 0.01
      %v388 = vmul.f32 %v351, 0.01
      %v389 = vmul.f32 %v354, 0.01
      %v390 = vmul.f32 %v357, 0.01
      %v391 = vmul.f32 %v360, 0.01
      %v392 = vmul.f32 %v363, 0.01
      %v393 = vmul.f32 %v366, 0.01
      %v394 = vmul.f32 %v369, 0.01
      %v395 = vmul.f32 %v372, 0.01
      %v396 = vmul.f32 %v375, 0.01
      %v397 = vmul.f32 %v378, 0.01
      %v398 = vmul.f32 %v381, 0.01
      %v399 = vmax.f32 %v336, %v383
      %v400 = vmax.f32 %v339, %v384
      %v401 = vmax.f32 %v342, %v385
      %v402 = vmax.f32 %v345, %v386
      %v403 = vmax.f32 %v348, %v387
      %v404 = vmax.f32 %v351, %v388
      %v405 = vmax.f32 %v354, %v389
      %v406 = vmax.f32 %v357, %v390
      %v407 = vmax.f32 %v360, %v391
      %v408 = vmax.f32 %v363, %v392
      %v409 = vmax.f32 %v366, %v393
      %v410 = vmax.f32 %v369, %v394
      %v411 = vmax.f32 %v372, %v395
      %v412 = vmax.f32 %v375, %v396
      %v413 = vmax.f32 %v378, %v397
      %v414 = vmax.f32 %v381, %v398
      %v415 = vld [vmem:[%s3] sm:$0xff]
      %v416 = vld [vmem:[%s3 + $0x8] sm:$0xff]
      %v417 = vld [vmem:[%s3 + $0x10] sm:$0xff]
      %v418 = vld [vmem:[%s3 + $0x18] sm:$0xff]
      %v419 = vld [vmem:[%s3 + $0x20] sm:$0xff]
      %v420 = vld [vmem:[%s3 + $0x28] sm:$0xff]
      %v421 = vld [vmem:[%s3 + $0x30] sm:$0xff]
      %v422 = vld [vmem:[%s3 + $0x38] sm:$0xff]
      %v423 = vld [vmem:[%s3 + $0x40] sm:$0xff]
      %v424 = vld [vmem:[%s3 + $0x48] sm:$0xff]
      %v425 = vld [vmem:[%s3 + $0x50] sm:$0xff]
      %v426 = vld [vmem:[%s3 + $0x58] sm:$0xff]
      %v427 = vld [vmem:[%s3 + $0x60] sm:$0xff]
      %v428 = vld [vmem:[%s3 + $0x68] sm:$0xff]
      %v429 = vld [vmem:[%s3 + $0x70] sm:$0xff]
      %v430 = vld [vmem:[%s3 + $0x78] sm:$0xff]
      %v431 = vld [vmem:[%s4] sm:$0x1]
      %v433 = vperm.slane %v431, 0
      %435 = vmatpush.msra.mxu0 %v430
      %436 = vmatpush.msra.mxu0 %v429
      %437 = vmatpush.msra.mxu0 %v428
      %438 = vmatpush.msra.mxu0 %v427
      %439 = vmatpush.msra.mxu0 %v426
      %440 = vmatpush.msra.mxu0 %v425
      %441 = vmatpush.msra.mxu0 %v424
      %442 = vmatpush.msra.mxu0 %v423
      %443 = vmatpush.msra.mxu0 %v422
      %444 = vmatpush.msra.mxu0 %v421
      %445 = vmatpush.msra.mxu0 %v420
      %446 = vmatpush.msra.mxu0 %v419
      %447 = vmatpush.msra.mxu0 %v418
      %448 = vmatpush.msra.mxu0 %v417
      %449 = vmatpush.msra.mxu0 %v416
      %450 = vmatpush.msra.mxu0 %v415
      %451 = vmatmul.f32.gmra.mxu0 %v399
      %v452 = vpop.f32.mrf.mxu0
      %v453 = vadd.f32 %v433, %v452
      %454 = vmatmul.f32.gmra.mxu0 %v400
      %v455 = vpop.f32.mrf.mxu0
      %v456 = vadd.f32 %v433, %v455
      %457 = vmatmul.f32.gmra.mxu0 %v401
      %v458 = vpop.f32.mrf.mxu0
      %v459 = vadd.f32 %v433, %v458
      %460 = vmatmul.f32.gmra.mxu0 %v402
      %v461 = vpop.f32.mrf.mxu0
      %v462 = vadd.f32 %v433, %v461
      %463 = vmatmul.f32.gmra.mxu0 %v403
      %v464 = vpop.f32.mrf.mxu0
      %v465 = vadd.f32 %v433, %v464
      %466 = vmatmul.f32.gmra.mxu0 %v404
      %v467 = vpop.f32.mrf.mxu0
      %v468 = vadd.f32 %v433, %v467
      %469 = vmatmul.f32.gmra.mxu0 %v405
      %v470 = vpop.f32.mrf.mxu0
      %v471 = vadd.f32 %v433, %v470
      %472 = vmatmul.f32.gmra.mxu0 %v406
      %v473 = vpop.f32.mrf.mxu0
      %v474 = vadd.f32 %v433, %v473
      %475 = vmatmul.f32.gmra.mxu0 %v407
      %v476 = vpop.f32.mrf.mxu0
      %v477 = vadd.f32 %v433, %v476
      %478 = vmatmul.f32.gmra.mxu0 %v408
      %v479 = vpop.f32.mrf.mxu0
      %v480 = vadd.f32 %v433, %v479
      %481 = vmatmul.f32.gmra.mxu0 %v409
      %v482 = vpop.f32.mrf.mxu0
      %v483 = vadd.f32 %v433, %v482
      %484 = vmatmul.f32.gmra.mxu0 %v410
      %v485 = vpop.f32.mrf.mxu0
      %v486 = vadd.f32 %v433, %v485
      %487 = vmatmul.f32.gmra.mxu0 %v411
      %v488 = vpop.f32.mrf.mxu0
      %v489 = vadd.f32 %v433, %v488
      %490 = vmatmul.f32.gmra.mxu0 %v412
      %v491 = vpop.f32.mrf.mxu0
      %v492 = vadd.f32 %v433, %v491
      %493 = vmatmul.f32.gmra.mxu0 %v413
      %v494 = vpop.f32.mrf.mxu0
      %v495 = vadd.f32 %v433, %v494
      %496 = vmatmul.f32.gmra.mxu0 %v414
      %v497 = vpop.f32.mrf.mxu0
      %v498 = vadd.f32 %v433, %v497
      %499 = vdwg.mxu0
      %v500 = vmul.f32 %v453, 0.01
      %v501 = vmul.f32 %v456, 0.01
      %v502 = vmul.f32 %v459, 0.01
      %v503 = vmul.f32 %v462, 0.01
      %v504 = vmul.f32 %v465, 0.01
      %v505 = vmul.f32 %v468, 0.01
      %v506 = vmul.f32 %v471, 0.01
      %v507 = vmul.f32 %v474, 0.01
      %v508 = vmul.f32 %v477, 0.01
      %v509 = vmul.f32 %v480, 0.01
      %v510 = vmul.f32 %v483, 0.01
      %v511 = vmul.f32 %v486, 0.01
      %v512 = vmul.f32 %v489, 0.01
      %v513 = vmul.f32 %v492, 0.01
      %v514 = vmul.f32 %v495, 0.01
      %v515 = vmul.f32 %v498, 0.01
      %v516 = vmax.f32 %v453, %v500
      %v517 = vmax.f32 %v456, %v501
      %v518 = vmax.f32 %v459, %v502
      %v519 = vmax.f32 %v462, %v503
      %v520 = vmax.f32 %v465, %v504
      %v521 = vmax.f32 %v468, %v505
      %v522 = vmax.f32 %v471, %v506
      %v523 = vmax.f32 %v474, %v507
      %v524 = vmax.f32 %v477, %v508
      %v525 = vmax.f32 %v480, %v509
      %v526 = vmax.f32 %v483, %v510
      %v527 = vmax.f32 %v486, %v511
      %v528 = vmax.f32 %v489, %v512
      %v529 = vmax.f32 %v492, %v513
      %v530 = vmax.f32 %v495, %v514
      %v531 = vmax.f32 %v498, %v515
      %v532 = vld [vmem:[%s5] sm:$0xff]
      %v533 = vld [vmem:[%s5 + $0x8] sm:$0xff]
      %v534 = vld [vmem:[%s5 + $0x10] sm:$0xff]
      %v535 = vld [vmem:[%s5 + $0x18] sm:$0xff]
      %v536 = vld [vmem:[%s5 + $0x20] sm:$0xff]
      %v537 = vld [vmem:[%s5 + $0x28] sm:$0xff]
      %v538 = vld [vmem:[%s5 + $0x30] sm:$0xff]
      %v539 = vld [vmem:[%s5 + $0x38] sm:$0xff]
      %v540 = vld [vmem:[%s5 + $0x40] sm:$0xff]
      %v541 = vld [vmem:[%s5 + $0x48] sm:$0xff]
      %v542 = vld [vmem:[%s5 + $0x50] sm:$0xff]
      %v543 = vld [vmem:[%s5 + $0x58] sm:$0xff]
      %v544 = vld [vmem:[%s5 + $0x60] sm:$0xff]
      %v545 = vld [vmem:[%s5 + $0x68] sm:$0xff]
      %v546 = vld [vmem:[%s5 + $0x70] sm:$0xff]
      %v547 = vld [vmem:[%s5 + $0x78] sm:$0xff]
      %v548 = vld [vmem:[%s6] sm:$0x1]
      %v550 = vperm.slane %v548, 0
      %552 = vmatpush.msra.mxu0 %v547
      %553 = vmatpush.msra.mxu0 %v546
      %554 = vmatpush.msra.mxu0 %v545
      %555 = vmatpush.msra.mxu0 %v544
      %556 = vmatpush.msra.mxu0 %v543
      %557 = vmatpush.msra.mxu0 %v542
      %558 = vmatpush.msra.mxu0 %v541
      %559 = vmatpush.msra.mxu0 %v540
      %560 = vmatpush.msra.mxu0 %v539
      %561 = vmatpush.msra.mxu0 %v538
      %562 = vmatpush.msra.mxu0 %v537
      %563 = vmatpush.msra.mxu0 %v536
      %564 = vmatpush.msra.mxu0 %v535
      %565 = vmatpush.msra.mxu0 %v534
      %566 = vmatpush.msra.mxu0 %v533
      %567 = vmatpush.msra.mxu0 %v532
      %568 = vmatmul.f32.gmra.mxu0 %v516
      %v569 = vpop.f32.mrf.mxu0
      %v570 = vadd.f32 %v550, %v569
      %571 = vmatmul.f32.gmra.mxu0 %v517
      %v572 = vpop.f32.mrf.mxu0
      %v573 = vadd.f32 %v550, %v572
      %574 = vmatmul.f32.gmra.mxu0 %v518
      %v575 = vpop.f32.mrf.mxu0
      %v576 = vadd.f32 %v550, %v575
      %577 = vmatmul.f32.gmra.mxu0 %v519
      %v578 = vpop.f32.mrf.mxu0
      %v579 = vadd.f32 %v550, %v578
      %580 = vmatmul.f32.gmra.mxu0 %v520
      %v581 = vpop.f32.mrf.mxu0
      %v582 = vadd.f32 %v550, %v581
      %583 = vmatmul.f32.gmra.mxu0 %v521
      %v584 = vpop.f32.mrf.mxu0
      %v585 = vadd.f32 %v550, %v584
      %586 = vmatmul.f32.gmra.mxu0 %v522
      %v587 = vpop.f32.mrf.mxu0
      %v588 = vadd.f32 %v550, %v587
      %589 = vmatmul.f32.gmra.mxu0 %v523
      %v590 = vpop.f32.mrf.mxu0
      %v591 = vadd.f32 %v550, %v590
      %592 = vmatmul.f32.gmra.mxu0 %v524
      %v593 = vpop.f32.mrf.mxu0
      %v594 = vadd.f32 %v550, %v593
      %595 = vmatmul.f32.gmra.mxu0 %v525
      %v596 = vpop.f32.mrf.mxu0
      %v597 = vadd.f32 %v550, %v596
      %598 = vmatmul.f32.gmra.mxu0 %v526
      %v599 = vpop.f32.mrf.mxu0
      %v600 = vadd.f32 %v550, %v599
      %601 = vmatmul.f32.gmra.mxu0 %v527
      %v602 = vpop.f32.mrf.mxu0
      %v603 = vadd.f32 %v550, %v602
      %604 = vmatmul.f32.gmra.mxu0 %v528
      %v605 = vpop.f32.mrf.mxu0
      %v606 = vadd.f32 %v550, %v605
      %607 = vmatmul.f32.gmra.mxu0 %v529
      %v608 = vpop.f32.mrf.mxu0
      %v609 = vadd.f32 %v550, %v608
      %610 = vmatmul.f32.gmra.mxu0 %v530
      %v611 = vpop.f32.mrf.mxu0
      %v612 = vadd.f32 %v550, %v611
      %613 = vmatmul.f32.gmra.mxu0 %v531
      %v614 = vpop.f32.mrf.mxu0
      %v615 = vadd.f32 %v550, %v614
      %616 = vdwg.mxu0
      %617 = vst [vmem:[%s280] sm:$0xff] %v570
      %618 = vst [vmem:[%s280 + $0x8] sm:$0xff] %v573
      %619 = vst [vmem:[%s280 + $0x10] sm:$0xff] %v576
      %620 = vst [vmem:[%s280 + $0x18] sm:$0xff] %v579
      %621 = vst [vmem:[%s280 + $0x20] sm:$0xff] %v582
      %622 = vst [vmem:[%s280 + $0x28] sm:$0xff] %v585
      %623 = vst [vmem:[%s280 + $0x30] sm:$0xff] %v588
      %624 = vst [vmem:[%s280 + $0x38] sm:$0xff] %v591
      %625 = vst [vmem:[%s280 + $0x40] sm:$0xff] %v594
      %626 = vst [vmem:[%s280 + $0x48] sm:$0xff] %v597
      %627 = vst [vmem:[%s280 + $0x50] sm:$0xff] %v600
      %628 = vst [vmem:[%s280 + $0x58] sm:$0xff] %v603
      %629 = vst [vmem:[%s280 + $0x60] sm:$0xff] %v606
      %630 = vst [vmem:[%s280 + $0x68] sm:$0xff] %v609
      %631 = vst [vmem:[%s280 + $0x70] sm:$0xff] %v612
      %632 = vst [vmem:[%s280 + $0x78] sm:$0xff] %v615
      %s633 = smul.u32 16, %s18
      %p634 = scmp.lt.s32.totalorder %s633, 31
      %s635 = scalar_select %p634, %s633, 31
      %s636 = smul.addr %s635, 8
      %s637 = scalar_lea.vmem %s7, %s636
      // Predicated region
      $region49: #{classification_head.1} parent=47 // pred_check
        %p638 = pneg %p188
      $region50: #{classification_head.1} parent=47 // pred_check_branch
        %640 = sbr.rel (%p638) target = $region52
      $region51: #{classification_head.1} parent=47 // pred_region
        %s641 = smul.u32 16, %s18
      $region52: #{classification_head.1} parent=47 // pred_fallthru
        _
    $region48: #{classification_head.1} parent=5 // pred_fallthru
      _
    %p642 = scmp.le.s32.totalorder 2, %s13
    // Predicated region
    $region53: #{classification_head.1} parent=5 // pred_check
      %p643 = pneg %p642
    $region54: #{classification_head.1} parent=5 // pred_check_branch
      %645 = sbr.rel (%p643) target = $region56
    $region55: #{classification_head.1} parent=5 // pred_region
      %s646 = ssub.s32 %s13, 2
      // Predicated region
      $region57: #{classification_head.1} parent=55 // pred_check
        %p647 = pneg %p194
      $region58: #{classification_head.1} parent=55 // pred_check_branch
        %649 = sbr.rel (%p647) target = $region60
      $region59: #{classification_head.1} parent=55 // pred_region
        %s650 = smul.u32 16, %s19
        %p651 = scmp.lt.s32.totalorder %s650, 31
        %s652 = scalar_select %p651, %s650, 31
        %s653 = smul.addr %s652, 8
        %s654 = scalar_lea.vmem %s7, %s653
      $region60: #{classification_head.1} parent=55 // pred_fallthru
        _
    $region56: #{classification_head.1} parent=5 // pred_fallthru
      _
  $region6: #{classification_head.1} parent=0 // loop_footer
    %s17 = sadd.s32 1, %s13
  $region7: #{classification_head.1} parent=0 // loop_footer_branch
    %12 = sbr.rel target = $region3
  $region8: #{classification_head.1} parent=0 // loop_exit
    _

</llo_original>
